<compile_context>
chip_gen: v7x
topology: tpu7x:2x2x1
jax: 0.10.0
libtpu: 0.0.40
codegen_flags: <defaults>
</compile_context>

<pallas_src>
import math

import jax
import jax.numpy as jnp
from jax.experimental import pallas as pl
from jax.experimental.pallas import tpu as pltpu

_LANE = 128
_MIB = 1024 * 1024


def _build_positional_embedding(context_length: int,
                                max_sequence_length: int = 500) -> jnp.ndarray:
    """Deterministic PE buffer, same construction as the PyTorch __init__."""
    position = jnp.arange(max_sequence_length, dtype=jnp.float32)[:, None]      # (L, 1)
    scale = jnp.exp(
        jnp.arange(0, context_length, 2, dtype=jnp.float32)
        * (-math.log(10000.0) / context_length)
    )                                                                            # (ceil(D/2),)
    angles = position * scale                                                    # (L, ceil(D/2))
    pe = jnp.zeros((max_sequence_length, context_length), dtype=jnp.float32)
    pe = pe.at[:, 0::2].set(jnp.sin(angles))
    pe = pe.at[:, 1::2].set(jnp.cos(angles[:, : context_length // 2]))
    return pe[None, :, :]                                                        # (1, L, D) fp32


def _add_pe_kernel(x_ref, pe_ref, o_ref):
    # x_ref/o_ref: (B, tile_c) in the input dtype; pe_ref: (1, tile_c) fp32.
    # Do the add in fp32 (matches the PyTorch fp32 PE buffer, rounds once).
    o_ref[...] = (x_ref[...].astype(jnp.float32) + pe_ref[...]).astype(o_ref.dtype)


def _round_up(x: int, m: int) -> int:
    return -(-x // m) * m


def _device_kind() -> str:
    try:
        return jax.devices()[0].device_kind.lower()
    except Exception:
        return ""


def _sublane_multiple(itemsize: int) -> int:
    # Rows per native VMEM tile: (8,128) f32, (16,128) bf16, (32,128) int8/fp8.
    return {4: 8, 2: 16, 1: 32}.get(itemsize, 8)


def positional_encoding_forward(inputs: jnp.ndarray,
                                pe: jnp.ndarray,
                                *,
                                min_pallas_bytes: int = 256 * 1024,
                                max_block_bytes: int | None = None) -> jnp.ndarray:
    """inputs: (B, S, D); pe: (1, maxSeqLen, D) fp32.  Returns inputs + pe[:, :S, :]."""
    B, S, D = inputs.shape
    assert pe.ndim == 3 and pe.shape[0] == 1 and pe.shape[2] == D, "PE table/input mismatch"
    L = pe.shape[1]
    assert S <= L, f"sequence length {S} exceeds maxSequenceLength {L}"

    x_dtype = inputs.dtype
    itemsize = jnp.dtype(x_dtype).itemsize
    C = S * D                                  # flattened feature dim per batch row
    total_bytes = B * C * itemsize

    # Tiny / non-tileable problems: let XLA fuse the broadcast-add.
    if total_bytes < min_pallas_bytes or C < _LANE:
        out = inputs.astype(jnp.float32) + jax.lax.slice(pe, (0, 0, 0), (1, S, D))
        return out.astype(x_dtype)

    kind = _device_kind()
    num_tc = 2 if "v7" in kind else 1          # v7x: 2 TensorCores share the grid
    if max_block_bytes is None:
        if "v7" in kind:
            max_block_bytes = 8 * _MIB         # 3.2 TB/s -> amortize 0.35us/step harder
        elif "v6" in kind:
            max_block_bytes = 4 * _MIB
        else:
            max_block_bytes = 2 * _MIB         # v5e / unknown / interpret

    # Lane-dense 2-D views (contiguous reshapes -> layout plumbing only).
    # The PE table is passed WHOLE; the grid only covers the first C columns,
    # which is exactly pe[:, :S, :] flattened -> no per-call slice/cast.
    x2 = inputs.reshape(B, C)
    pe2 = pe.reshape(1, L * D)

    # ---- column-tile sizing -------------------------------------------------
    # (a) VMEM: a (B, tile_c) block occupies round_up(B, sub) sublane rows.
    sub = _sublane_multiple(itemsize)
    b_pad = _round_up(B, sub)
    bytes_per_col = 2 * (2 * b_pad * itemsize) + 2 * (8 * 4)   # dbl-buffered x+out, fp32 pe
    vmem_budget = 28 * _MIB
    tile_c_vmem = max(_LANE, vmem_budget // bytes_per_col)
    # (b) HBM amortization: target max_block_bytes of *real* x data per block.
    tile_c_hbm = max(_LANE, max_block_bytes // (B * itemsize))
    tile_c = min(C, tile_c_vmem, tile_c_hbm)
    tile_c = max(_LANE, (tile_c // _LANE) * _LANE)

    num_blocks = pl.cdiv(C, tile_c)
    # Two-TensorCore chips: keep an even, balanced block count on the
    # ("parallel",) axis.  Single-TC chips keep the biggest block that fits.
    if num_tc == 2 and C >= 2 * _LANE and num_blocks % 2 == 1:
        desired = num_blocks + 1 if num_blocks > 1 else 2
        tile_c = _round_up(pl.cdiv(C, desired), _LANE)
        num_blocks = pl.cdiv(C, tile_c)

    grid = (num_blocks,)

    out2 = pl.pallas_call(
        _add_pe_kernel,
        out_shape=jax.ShapeDtypeStruct((B, C), x_dtype),
        grid_spec=pl.GridSpec(
            grid=grid,
            in_specs=[
                pl.BlockSpec((B, tile_c), lambda j: (0, j)),   # x column tile (all batches)
                pl.BlockSpec((1, tile_c), lambda j: (0, j)),   # shared fp32 PE column tile
            ],
            out_specs=pl.BlockSpec((B, tile_c), lambda j: (0, j)),
        ),
        compiler_params=pltpu.CompilerParams(
            dimension_semantics=("parallel",),
            vmem_limit_bytes=48 * _MIB,
        ),
        cost_estimate=pl.CostEstimate(
            flops=B * C,
            transcendentals=0,
            bytes_accessed=2 * B * C * itemsize + C * 4,
        ),
    )(x2, pe2)

    return out2.reshape(B, S, D)


if __name__ == "__main__":
    key = jax.random.PRNGKey(0)
    k1, k2, k3 = jax.random.split(key, 3)
    max_seq_len = 500

    # --- Test 1: module-spec small shape (B=2, S=8, D=32), f32.
    # Force the Pallas path (min_pallas_bytes=0) so the kernel itself runs.
    B, S, D = 2, 8, 32
    x_small = jax.random.normal(k1, (B, S, D), dtype=jnp.float32)
    pe_small = _build_positional_embedding(D, max_seq_len)
    out_small = jax.block_until_ready(
        positional_encoding_forward(x_small, pe_small, min_pallas_bytes=0))
    ref_small = x_small + pe_small[:, :S, :]
    assert out_small.shape == (B, S, D)
    assert jnp.allclose(out_small, ref_small, atol=1e-6), "small-shape mismatch vs reference"

    # Fallback (XLA) path for tiny problems must also match.
    out_fb = jax.block_until_ready(positional_encoding_forward(x_small, pe_small))
    assert jnp.allclose(out_fb, ref_small, atol=1e-6), "fallback mismatch vs reference"

    # --- Test 2: S == maxSequenceLength (valid upper bound), bf16 tiled path.
    B2, S2, D2 = 4, 500, 256
    x_big = jax.random.normal(k2, (B2, S2, D2), dtype=jnp.bfloat16)
    pe_big = _build_positional_embedding(D2, max_seq_len)
    out_big = jax.block_until_ready(positional_encoding_forward(x_big, pe_big))
    ref_big = (x_big.astype(jnp.float32) + pe_big[:, :S2, :]).astype(jnp.bfloat16)
    assert out_big.shape == (B2, S2, D2)
    assert jnp.allclose(out_big.astype(jnp.float32), ref_big.astype(jnp.float32),
                        atol=1e-2, rtol=1e-2), "bf16-shape mismatch vs reference"

    # --- Test 3: multi-block grid with a partial last block (C % tile_c != 0).
    B3, S3, D3 = 2, 500, 128
    x_mid = jax.random.normal(k3, (B3, S3, D3), dtype=jnp.float32)
    pe_mid = _build_positional_embedding(D3, max_seq_len)
    out_mid = jax.block_until_ready(
        positional_encoding_forward(x_mid, pe_mid, max_block_bytes=64 * 1024))
    ref_mid = x_mid + pe_mid[:, :S3, :]
    assert out_mid.shape == (B3, S3, D3)
    assert jnp.allclose(out_mid, ref_mid, atol=1e-6), "partial-block mismatch vs reference"

    print("KERNEL_OK")
</pallas_src>

<mosaic_0001>
module attributes {stable_mosaic.version = 11 : i64} {
  func.func @_add_pe_kernel(%arg0: i32, %arg1: memref<2x256xf32, #tpu.memory_space<vmem>>, %arg2: memref<1x256xf32, #tpu.memory_space<vmem>>, %arg3: memref<2x256xf32, #tpu.memory_space<vmem>>) attributes {dimension_semantics = [#tpu.dimension_semantics<parallel>], iteration_bounds = array<i64: 1>, scalar_prefetch = 0 : i64, scratch_operands = 0 : i64, tpu.core_type = #tpu.core_type<tc>, window_params = [{transform_indices = @transform_0, window_bounds = array<i64: 2, 256>}, {transform_indices = @transform_1, window_bounds = array<i64: 1, 256>}, {transform_indices = @transform_2, window_bounds = array<i64: 2, 256>}]} {
    %c0 = arith.constant 0 : index
    %c0_0 = arith.constant 0 : index
    %0 = vector.load %arg1[%c0, %c0_0] : memref<2x256xf32, #tpu.memory_space<vmem>>, vector<2x256xf32>
    %c0_1 = arith.constant 0 : index
    %c0_2 = arith.constant 0 : index
    %1 = vector.load %arg2[%c0_1, %c0_2] : memref<1x256xf32, #tpu.memory_space<vmem>>, vector<1x256xf32>
    %2 = vector.broadcast %1 : vector<1x256xf32> to vector<2x256xf32>
    %3 = arith.addf %0, %2 : vector<2x256xf32>
    %c0_3 = arith.constant 0 : index
    %c0_4 = arith.constant 0 : index
    %4 = vector.load %arg3[%c0_3, %c0_4] : memref<2x256xf32, #tpu.memory_space<vmem>>, vector<2x256xf32>
    tpu.vector_store %arg3[%c0_3, %c0_4], %3 {strides = array<i32>} : memref<2x256xf32, #tpu.memory_space<vmem>>, vector<2x256xf32>,
    return
  }
  func.func @transform_0(%arg0: i32) -> (i32, i32) {
    %c0_i32 = arith.constant 0 : i32
    %c0_i32_0 = arith.constant 0 : i32
    return %c0_i32, %arg0 : i32, i32
  }
  func.func @transform_1(%arg0: i32) -> (i32, i32) {
    %c0_i32 = arith.constant 0 : i32
    %c0_i32_0 = arith.constant 0 : i32
    return %c0_i32, %arg0 : i32, i32
  }
  func.func @transform_2(%arg0: i32) -> (i32, i32) {
    %c0_i32 = arith.constant 0 : i32
    %c0_i32_0 = arith.constant 0 : i32
    return %c0_i32, %arg0 : i32, i32
  }
}

</mosaic_0001>

<llo_original>
// kernel: tpu_custom_call.1
$region0: #{tpu_custom_call.1}
  #allocation0 [shape = 'u32[]', space=smem, size = 0x4, offset = 0x4, fixed_abs, tag = 'smem constant byte address 0x4 - core index']
  #allocation1 [shape = 'u32[144,128]{1,0:T(1,128)}', space=vmem, size = 0x12000, scoped, tag = 'internal scratch']
  %s0 = inlined_call_operand.hbm [shape: f32[2,256], index: 0, kind: input, shape index: {}]
  %s1 = inlined_call_operand.hbm [shape: f32[1,16000], index: 1, kind: input, shape index: {}]
  %s2 = inlined_call_operand.hbm [shape: f32[2,256], index: 2, kind: output, shape index: {}]
  %s3 = sld [smem:[#allocation0]]
  $region26: #{tpu_custom_call.1} parent=0
    _
  %s5 = ssub.s32 1, %s3
  %s6 = scalar_select 0, %s5, %s3
  $region1: #{tpu_custom_call.1} parent=0
    #allocation2 [shape = 'u8[2048]{0}', space=vmem, size = 0x800, scoped, tag = 'input window, operand 0, single buffered']
    #allocation3 [shape = 's32[1]{0}', space=sflag, size = 0x4, scoped, tag = 'scoped memory for tpu_custom_call.1']
    #allocation4 [shape = 's32[1]{0}', space=sflag, size = 0x4, scoped, tag = 'scoped memory for tpu_custom_call.1']
    #allocation5 [shape = 'u8[1024]{0}', space=vmem, size = 0x400, scoped, tag = 'input window, operand 1, single buffered']
    #allocation6 [shape = 's32[1]{0}', space=sflag, size = 0x4, scoped, tag = 'scoped memory for tpu_custom_call.1']
    #allocation7 [shape = 'u8[2048]{0}', space=vmem, size = 0x800, scoped, tag = 'output window, operand 0, single buffered']
    %7 = vsyncpa [#allocation3], 0
    %8 = vsyncpa [#allocation6], 0
    %9 = vsyncpa [#allocation4], 0
    // Predicated region
    $region2: #{tpu_custom_call.1} parent=1 // pred_check
      _
    $region3: #{tpu_custom_call.1} parent=1 // pred_check_branch
      %11 = sbr.rel (0) target = $region5
    $region4: #{tpu_custom_call.1} parent=1 // pred_region
      %s13 = ssub.s32 64, 64
      %14 = vsyncadd [#allocation3], %s13
      %s16 = sshll.u32 [#allocation2], 4
      %s17 = int_to_ptr.vmem [resolvable:$true] %s16
      %19 = dma.hbm_to_vmem [thread:$0]  %s0, 64, %s17, [#allocation3]
    $region5: #{tpu_custom_call.1} parent=1 // pred_fallthru
      _
    // Predicated region
    $region6: #{tpu_custom_call.1} parent=1 // pred_check
      _
    $region7: #{tpu_custom_call.1} parent=1 // pred_check_branch
      %21 = sbr.rel (0) target = $region9
    $region8: #{tpu_custom_call.1} parent=1 // pred_region
      %s23 = ssub.s32 32, 32
      %24 = vsyncadd [#allocation6], %s23
      %s26 = sshll.u32 [#allocation5], 4
      %s27 = int_to_ptr.vmem [resolvable:$true] %s26
      %29 = dma.hbm_to_vmem [thread:$0]  %s1, 32, %s27, [#allocation6]
    $region9: #{tpu_custom_call.1} parent=1 // pred_fallthru
      _
    // Predicated region
    $region10: #{tpu_custom_call.1} parent=1 // pred_check
      _
    $region11: #{tpu_custom_call.1} parent=1 // pred_check_branch
      %31 = sbr.rel (0) target = $region13
    $region12: #{tpu_custom_call.1} parent=1 // pred_region
      %32 = dma.done [#allocation3], 64
    $region13: #{tpu_custom_call.1} parent=1 // pred_fallthru
      _
    // Predicated region
    $region14: #{tpu_custom_call.1} parent=1 // pred_check
      _
    $region15: #{tpu_custom_call.1} parent=1 // pred_check_branch
      %34 = sbr.rel (0) target = $region17
    $region16: #{tpu_custom_call.1} parent=1 // pred_region
      %35 = dma.done [#allocation6], 32
    $region17: #{tpu_custom_call.1} parent=1 // pred_fallthru
      _
    %v36 = vld [vmem:[#allocation2] sm:$0xf]
    %v37 = vld [vmem:[#allocation5] sm:$0x3]
    %v39 = vlaneseq
    %v40 = vshrl.u32 %v39, 7
    %v41 = vsub.s32 0, %v40
    %v42 = vrot.slane %v37, %v41
    %v43 = vlaneseq
    %v44 = vshrl.u32 %v43, 7
    %v45 = vsub.s32 1, %v44
    %v46 = vrot.slane %v37, %v45
    %v47 = vcombine.low %v42, %v46
    %v49 = vunpack.c.l.s4 1983009808
    %v50 = vunpack.c.0.s8 %v49
    %v51 = vlaneseq
    %v52 = vshrl.u32 %v51, 7
    %v53 = vsub.s32 %v50, %v52
    %v54 = vrot.slane %v47, %v53
    %v56 = vadd.f32 %v36, %v54
    %57 = vst [vmem:[#allocation7] sm:$0xf] %v56
    // Predicated region
    $region18: #{tpu_custom_call.1} parent=1 // pred_check
      _
    $region19: #{tpu_custom_call.1} parent=1 // pred_check_branch
      %59 = sbr.rel (0) target = $region21
    $region20: #{tpu_custom_call.1} parent=1 // pred_region
      %s61 = ssub.s32 64, 64
      %62 = vsyncadd [#allocation4], %s61
      %s64 = sshll.u32 [#allocation7], 4
      %s65 = int_to_ptr.vmem [resolvable:$true] %s64
      %67 = dma.vmem_to_hbm [thread:$0]  %s65, 64, %s2, [#allocation4]
    $region21: #{tpu_custom_call.1} parent=1 // pred_fallthru
      _
    // Predicated region
    $region22: #{tpu_custom_call.1} parent=1 // pred_check
      _
    $region23: #{tpu_custom_call.1} parent=1 // pred_check_branch
      %69 = sbr.rel (0) target = $region25
    $region24: #{tpu_custom_call.1} parent=1 // pred_region
      %70 = dma.done [#allocation4], 64
    $region25: #{tpu_custom_call.1} parent=1 // pred_fallthru
      _
    %71 = vsyncpa [#allocation3], 1
    %72 = vsyncpa [#allocation6], 1
    %73 = vsyncpa [#allocation4], 1

</llo_original>
